<compile_context>
chip_gen: v6e
topology: v6e:2x2x1
jax: 0.10.0
libtpu: 0.0.40
codegen_flags: <defaults>
</compile_context>

<pallas_src>
import functools

import jax
import jax.numpy as jnp
from jax import lax
from jax.experimental import pallas as pl
from jax.experimental.pallas import tpu as pltpu

BN_EPS = 1e-5
_VMEM_LIMIT_BYTES = 48 * 1024 * 1024   # safe on v7x (64 MiB phys); roomy on v5e/v6e
_VMEM_BUDGET_BYTES = 36 * 1024 * 1024  # target working set when sizing the tile
_LANES_TARGET = 512                    # lane-width target for the MXU / stores
_MAX_TG = 64                           # bounds static unroll of the per-slab store loop


def _choose_tg(G, CK, K, Cout, H, H_out, past_t):
    """Number of (b, w_out) slabs batched per grid step, under a VMEM budget."""
    def vmem_bytes(tg):
        tgh = tg * H
        lw = tgh - past_t + 1
        x_blk = CK * tgh * 4
        o_blk = tg * Cout * H_out * 4
        rhs = K * lw * 4
        res = Cout * lw * 4
        msk = lw * 4
        w = Cout * K * 4
        return 2 * (x_blk + o_blk + msk) + w + rhs + 2 * res

    tg = min(G, max(1, pl.cdiv(_LANES_TARGET, H)), _MAX_TG)
    while tg > 1 and vmem_bytes(tg) > _VMEM_BUDGET_BYTES:
        tg -= 1
    # Prefer a nearby tile size that minimizes ragged-tile padding.
    best = tg
    for cand in range(max(1, tg // 2), tg + 1):
        pad_c = pl.cdiv(G, cand) * cand - G
        pad_b = pl.cdiv(G, best) * best - G
        if pad_c < pad_b or (pad_c == pad_b and cand > best):
            best = cand
    return best


@functools.partial(jax.jit, static_argnames=("past_t", "n_points"))
def agnostic_conv_block(x, conv_w, conv_b, bn_gamma, bn_beta, *, past_t, n_points):
    """Forward pass of AgnosticConvBlock. x: (B, n_inp, H, W) float32, NCHW."""
    del conv_b  # Cancels exactly under train-mode BatchNorm (mean subtraction).
    # TODO(synk): BatchNorm running_mean/running_var updates are training-only side
    # state with no effect on the train-mode forward output; not materialized here.
    B, C, H, W = x.shape
    Cout = conv_w.shape[0]
    H_out = H - past_t + 1
    W_out = W - n_points + 1
    CK = C * n_points
    K = past_t * CK
    G = B * W_out

    TG = _choose_tg(G, CK, K, Cout, H, H_out, past_t)
    num_tiles = pl.cdiv(G, TG)
    Gp = num_tiles * TG
    TGH = TG * H
    Lw = TGH - past_t + 1        # matmul lane width per tile
    merge_kh = (CK % 8 == 0)     # single K-deep contraction when sublane-aligned

    # ---- layout prep: one XLA transpose to (num_tiles, CK, TG*H), no im2col --------
    if W_out == 1:
        xp = x if Gp == B else jnp.pad(x, ((0, Gp - B), (0, 0), (0, 0), (0, 0)))
        x_t = (xp.reshape(num_tiles, TG, C, H, W)
                 .transpose(0, 2, 4, 1, 3)          # (tile, ci, kw, g, h)
                 .reshape(num_tiles, CK, TGH))
    else:
        # TODO(synk): handle the kw window in-kernel for W_out > 1 to avoid this
        # n_points-fold HBM inflation (typical use of this module has W_out == 1).
        cols = [x[:, :, :, kw:kw + W_out] for kw in range(n_points)]
        p = jnp.stack(cols, axis=-1)                       # (B, C, H, W_out, n_points)
        x_g = p.transpose(0, 3, 1, 4, 2).reshape(G, CK, H)
        if Gp != G:
            x_g = jnp.pad(x_g, ((0, Gp - G), (0, 0), (0, 0)))
        x_t = (x_g.reshape(num_tiles, TG, CK, H)
                   .transpose(0, 2, 1, 3)
                   .reshape(num_tiles, CK, TGH))
    x_t = x_t.astype(jnp.float32)

    # Weights (Cout, Cin, kH, kW) -> (Cout, K), K ordered (kh, ci, kw) to match the
    # in-kernel contraction-row order.
    w2 = conv_w.transpose(0, 2, 1, 3).reshape(Cout, K).astype(jnp.float32)

    # Per-tile validity mask over the Lw matmul columns: column c -> slab g = c // H,
    # time h = c % H; valid iff h < H_out and slab index is a real sample.
    col = jnp.arange(Lw)
    h_of_col = col % H
    g_of_col = col // H
    tiles = jnp.arange(num_tiles)
    valid = (h_of_col[None, :] < H_out) & ((tiles[:, None] * TG + g_of_col[None, :]) < G)
    mask = valid.astype(jnp.float32).reshape(num_tiles, 1, Lw)

    cparams = pltpu.CompilerParams(
        dimension_semantics=("parallel",),   # independent tiles; v7x megacore shard
        vmem_limit_bytes=_VMEM_LIMIT_BYTES)

    def _conv_tile(x_ref, w_ref):
        """Bias-free conv for the TG slabs of this tile: one wide MXU contraction."""
        if merge_kh:
            rhs = jnp.concatenate(
                [x_ref[0, :, kh:kh + Lw] for kh in range(past_t)], axis=0)  # (K, Lw)
            return jnp.dot(w_ref[...], rhs, preferred_element_type=jnp.float32)
        acc = None                      # fallback: past_t accumulated matmuls
        for kh in range(past_t):
            term = jnp.dot(w_ref[:, kh * CK:(kh + 1) * CK],
                           x_ref[0, :, kh:kh + Lw],
                           preferred_element_type=jnp.float32)
            acc = term if acc is None else acc + term
        return acc

    # ---- pass 1: per-tile BN statistics only (no conv writeback to HBM) -----------
    def _stats_kernel(x_ref, w_ref, mask_ref, stats_ref):
        res = _conv_tile(x_ref, w_ref)                    # (Cout, Lw)
        m = mask_ref[0]                                   # (1, Lw)
        count = jnp.sum(m, keepdims=True)                 # (1, 1)
        tsum = jnp.sum(res * m, axis=1, keepdims=True)    # (Cout, 1)
        tmean = tsum / count
        tm2 = jnp.sum((res - tmean) ** 2 * m, axis=1, keepdims=True)
        stats_ref[0] = jnp.stack([tsum, tm2], axis=0)     # (2, Cout, 1)

    stats = pl.pallas_call(
        _stats_kernel,
        out_shape=jax.ShapeDtypeStruct((num_tiles, 2, Cout, 1), jnp.float32),
        grid_spec=pltpu.PrefetchScalarGridSpec(
            num_scalar_prefetch=0,
            grid=(num_tiles,),
            in_specs=[pl.BlockSpec((1, CK, TGH), lambda t: (t, 0, 0)),
                      pl.BlockSpec((Cout, K), lambda t: (0, 0)),
                      pl.BlockSpec((1, 1, Lw), lambda t: (t, 0, 0))],
            out_specs=pl.BlockSpec((1, 2, Cout, 1), lambda t: (t, 0, 0, 0))),
        compiler_params=cparams,
        cost_estimate=pl.CostEstimate(
            flops=2 * num_tiles * Cout * K * Lw + 6 * num_tiles * Cout * Lw,
            transcendentals=0,
            bytes_accessed=4 * (num_tiles * (CK * TGH + Lw + 2 * Cout) + Cout * K)),
    )(x_t, w2, mask)

    # ---- tiny per-channel glue: Chan-combined mean/var -> folded scale/shift ------
    counts = (jnp.minimum(TG, G - tiles * TG) * H_out).astype(jnp.float32)   # (T,)
    tile_sum = stats[:, 0, :, 0]                                             # (T, Cout)
    tile_m2 = stats[:, 1, :, 0]
    n_total = jnp.float32(G * H_out)
    mean = jnp.sum(tile_sum, axis=0) / n_total                               # (Cout,)
    tile_mean = tile_sum / counts[:, None]
    m2 = (jnp.sum(tile_m2, axis=0)
          + jnp.sum(counts[:, None] * (tile_mean - mean[None, :]) ** 2, axis=0))
    var = jnp.maximum(m2 / n_total, 0.0)
    bscale = bn_gamma.astype(jnp.float32) * lax.rsqrt(var + BN_EPS)
    bshift = bn_beta.astype(jnp.float32) - mean * bscale
    bscale2 = bscale.reshape(Cout, 1)
    bshift2 = bshift.reshape(Cout, 1)

    # ---- pass 2: recompute conv tile, fused BN + ReLU, big lane-dense stores ------
    def _conv_bn_relu_kernel(x_ref, w_ref, s_ref, b_ref, o_ref):
        res = _conv_tile(x_ref, w_ref)                               # (Cout, Lw)
        res = jnp.maximum(res * s_ref[...] + b_ref[...], 0.0)
        for g in range(TG):                                          # static unroll
            o_ref[g] = res[:, g * H:g * H + H_out]

    out_t = pl.pallas_call(
        _conv_bn_relu_kernel,
        out_shape=jax.ShapeDtypeStruct((G, Cout, H_out), jnp.float32),
        grid_spec=pltpu.PrefetchScalarGridSpec(
            num_scalar_prefetch=0,
            grid=(num_tiles,),
            in_specs=[pl.BlockSpec((1, CK, TGH), lambda t: (t, 0, 0)),
                      pl.BlockSpec((Cout, K), lambda t: (0, 0)),
                      pl.BlockSpec((Cout, 1), lambda t: (0, 0)),
                      pl.BlockSpec((Cout, 1), lambda t: (0, 0))],
            out_specs=pl.BlockSpec((TG, Cout, H_out), lambda t: (t, 0, 0))),
        compiler_params=cparams,
        cost_estimate=pl.CostEstimate(
            flops=2 * num_tiles * Cout * K * Lw + 3 * num_tiles * Cout * Lw,
            transcendentals=0,
            bytes_accessed=4 * (num_tiles * CK * TGH + Cout * K + 2 * Cout
                                + G * Cout * H_out)),
    )(x_t, w2, bscale2, bshift2)

    if W_out == 1:
        # (B, Cout, H_out) -> NCHW (B, Cout, H_out, 1): metadata-only reshape, free.
        return out_t.reshape(B, Cout, H_out, 1)
    # TODO(synk): fold this transpose into the pass-2 out_spec for W_out > 1.
    return out_t.reshape(B, W_out, Cout, H_out).transpose(0, 2, 3, 1)


def _reference(x, conv_w, conv_b, bn_gamma, bn_beta):
    # Pure-JAX reference (lax conv + train-mode BN + ReLU) for correctness checking.
    conv = lax.conv_general_dilated(
        x, conv_w, window_strides=(1, 1), padding="VALID",
        dimension_numbers=("NCHW", "OIHW", "NCHW"))
    conv = conv + conv_b.reshape(1, -1, 1, 1)
    mean = jnp.mean(conv, axis=(0, 2, 3), keepdims=True)
    var = jnp.mean((conv - mean) ** 2, axis=(0, 2, 3), keepdims=True)
    normed = (conv - mean) / jnp.sqrt(var + BN_EPS)
    out = normed * bn_gamma.reshape(1, -1, 1, 1) + bn_beta.reshape(1, -1, 1, 1)
    return jnp.maximum(out, 0.0)


if __name__ == "__main__":
    # Module hyperparameters (num_conv is unused in the reference forward).
    n_inp, n_points, past_t, hidden_dim = 4, 8, 4, 32
    B, H, W = 2, 16, n_points          # W == n_points -> W_out == 1 (typical use)

    key = jax.random.PRNGKey(0)
    kx, kw_, kb, kg, kbe = jax.random.split(key, 5)
    x = jax.random.normal(kx, (B, n_inp, H, W), dtype=jnp.float32)
    conv_w = jax.random.normal(kw_, (hidden_dim, n_inp, past_t, n_points),
                               dtype=jnp.float32) * 0.1
    conv_b = jax.random.normal(kb, (hidden_dim,), dtype=jnp.float32) * 0.1
    bn_gamma = jnp.ones((hidden_dim,), dtype=jnp.float32) + \
        0.1 * jax.random.normal(kg, (hidden_dim,), dtype=jnp.float32)
    bn_beta = 0.1 * jax.random.normal(kbe, (hidden_dim,), dtype=jnp.float32)

    out = agnostic_conv_block(x, conv_w, conv_b, bn_gamma, bn_beta,
                              past_t=past_t, n_points=n_points)
    out = jax.block_until_ready(out)

    ref = _reference(x, conv_w, conv_b, bn_gamma, bn_beta)
    assert out.shape == ref.shape, (out.shape, ref.shape)
    assert jnp.allclose(out, ref, atol=1e-4, rtol=1e-4), \
        float(jnp.max(jnp.abs(out - ref)))
    print("KERNEL_OK")
</pallas_src>

<mosaic_0001>
module attributes {stable_mosaic.version = 11 : i64} {
  func.func @_conv_bn_relu_kernel(%arg0: i32, %arg1: memref<1x32x32xf32, #tpu.memory_space<vmem>>, %arg2: memref<32x128xf32, #tpu.memory_space<vmem>>, %arg3: memref<32x1xf32, #tpu.memory_space<vmem>>, %arg4: memref<32x1xf32, #tpu.memory_space<vmem>>, %arg5: memref<2x32x13xf32, #tpu.memory_space<vmem>>) attributes {dimension_semantics = [#tpu.dimension_semantics<parallel>], iteration_bounds = array<i64: 1>, scalar_prefetch = 0 : i64, scratch_operands = 0 : i64, tpu.core_type = #tpu.core_type<tc>, window_params = [{transform_indices = @transform_0, window_bounds = array<i64: 1, 32, 32>}, {pipeline_mode = #tpu.pipeline_mode<synchronous>, transform_indices = @transform_1, window_bounds = array<i64: 32, 128>}, {pipeline_mode = #tpu.pipeline_mode<synchronous>, transform_indices = @transform_2, window_bounds = array<i64: 32, 1>}, {pipeline_mode = #tpu.pipeline_mode<synchronous>, transform_indices = @transform_3, window_bounds = array<i64: 32, 1>}, {transform_indices = @transform_4, window_bounds = array<i64: 2, 32, 13>}]} {
    %c0 = arith.constant 0 : index
    %c0_0 = arith.constant 0 : index
    %c0_1 = arith.constant 0 : index
    %0 = vector.load %arg1[%c0, %c0_0, %c0_1] : memref<1x32x32xf32, #tpu.memory_space<vmem>>, vector<1x32x29xf32>
    %1 = vector.shape_cast %0 : vector<1x32x29xf32> to vector<32x29xf32>
    %c0_2 = arith.constant 0 : index
    %c0_3 = arith.constant 0 : index
    %c1 = arith.constant 1 : index
    %2 = vector.load %arg1[%c0_2, %c0_3, %c1] : memref<1x32x32xf32, #tpu.memory_space<vmem>>, vector<1x32x29xf32>
    %3 = vector.shape_cast %2 : vector<1x32x29xf32> to vector<32x29xf32>
    %c0_4 = arith.constant 0 : index
    %c0_5 = arith.constant 0 : index
    %c2 = arith.constant 2 : index
    %4 = vector.load %arg1[%c0_4, %c0_5, %c2] : memref<1x32x32xf32, #tpu.memory_space<vmem>>, vector<1x32x29xf32>
    %5 = vector.shape_cast %4 : vector<1x32x29xf32> to vector<32x29xf32>
    %c0_6 = arith.constant 0 : index
    %c0_7 = arith.constant 0 : index
    %c3 = arith.constant 3 : index
    %6 = vector.load %arg1[%c0_6, %c0_7, %c3] : memref<1x32x32xf32, #tpu.memory_space<vmem>>, vector<1x32x29xf32>
    %7 = vector.shape_cast %6 : vector<1x32x29xf32> to vector<32x29xf32>
    %8 = tpu.concatenate %1, %3, %5, %7 in 0 : vector<32x29xf32>, vector<32x29xf32>, vector<32x29xf32>, vector<32x29xf32> -> vector<128x29xf32>
    %c0_8 = arith.constant 0 : index
    %c0_9 = arith.constant 0 : index
    %9 = vector.load %arg2[%c0_8, %c0_9] : memref<32x128xf32, #tpu.memory_space<vmem>>, vector<32x128xf32>
    %cst = arith.constant dense<0.000000e+00> : vector<32x29xf32>
    %10 = tpu.matmul %9, %8, %cst {dimension_numbers = #tpu.dot_dimension_numbers<[1], [0], [0], [1], [0, 0, 1, 1], [], []>} : vector<32x128xf32>, vector<128x29xf32>, vector<32x29xf32> -> vector<32x29xf32>
    %c0_10 = arith.constant 0 : index
    %c0_11 = arith.constant 0 : index
    %11 = vector.load %arg3[%c0_10, %c0_11] : memref<32x1xf32, #tpu.memory_space<vmem>>, vector<32x1xf32>
    %12 = vector.broadcast %11 : vector<32x1xf32> to vector<32x29xf32>
    %13 = arith.mulf %10, %12 : vector<32x29xf32>
    %c0_12 = arith.constant 0 : index
    %c0_13 = arith.constant 0 : index
    %14 = vector.load %arg4[%c0_12, %c0_13] : memref<32x1xf32, #tpu.memory_space<vmem>>, vector<32x1xf32>
    %15 = vector.broadcast %14 : vector<32x1xf32> to vector<32x29xf32>
    %16 = arith.addf %13, %15 : vector<32x29xf32>
    %cst_14 = arith.constant 0.000000e+00 : f32
    %17 = vector.broadcast %cst_14 : f32 to vector<32x29xf32>
    %18 = arith.maximumf %16, %17 : vector<32x29xf32>
    %19 = vector.extract_strided_slice %18 {offsets = [0, 0], sizes = [32, 13], strides = [1, 1]} : vector<32x29xf32> to vector<32x13xf32>
    %c0_15 = arith.constant 0 : index
    %c0_16 = arith.constant 0 : index
    %c0_17 = arith.constant 0 : index
    %20 = vector.load %arg5[%c0_15, %c0_16, %c0_17] : memref<2x32x13xf32, #tpu.memory_space<vmem>>, vector<1x32x13xf32>
    %21 = vector.shape_cast %20 : vector<1x32x13xf32> to vector<32x13xf32>
    %22 = vector.shape_cast %19 : vector<32x13xf32> to vector<1x32x13xf32>
    tpu.vector_store %arg5[%c0_15, %c0_16, %c0_17], %22 {strides = array<i32>} : memref<2x32x13xf32, #tpu.memory_space<vmem>>, vector<1x32x13xf32>,
    %23 = vector.extract_strided_slice %18 {offsets = [0, 16], sizes = [32, 13], strides = [1, 1]} : vector<32x29xf32> to vector<32x13xf32>
    %c1_18 = arith.constant 1 : index
    %c0_19 = arith.constant 0 : index
    %c0_20 = arith.constant 0 : index
    %24 = vector.load %arg5[%c1_18, %c0_19, %c0_20] : memref<2x32x13xf32, #tpu.memory_space<vmem>>, vector<1x32x13xf32>
    %25 = vector.shape_cast %24 : vector<1x32x13xf32> to vector<32x13xf32>
    %26 = vector.shape_cast %23 : vector<32x13xf32> to vector<1x32x13xf32>
    tpu.vector_store %arg5[%c1_18, %c0_19, %c0_20], %26 {strides = array<i32>} : memref<2x32x13xf32, #tpu.memory_space<vmem>>, vector<1x32x13xf32>,
    return
  }
  func.func @transform_0(%arg0: i32) -> (i32, i32, i32) {
    %c0_i32 = arith.constant 0 : i32
    %c0_i32_0 = arith.constant 0 : i32
    %c0_i32_1 = arith.constant 0 : i32
    return %arg0, %c0_i32, %c0_i32_0 : i32, i32, i32
  }
  func.func @transform_1(%arg0: i32) -> (i32, i32) {
    %c0_i32 = arith.constant 0 : i32
    %c0_i32_0 = arith.constant 0 : i32
    %c0_i32_1 = arith.constant 0 : i32
    return %c0_i32, %c0_i32_0 : i32, i32
  }
  func.func @transform_2(%arg0: i32) -> (i32, i32) {
    %c0_i32 = arith.constant 0 : i32
    %c0_i32_0 = arith.constant 0 : i32
    %c0_i32_1 = arith.constant 0 : i32
    return %c0_i32, %c0_i32_0 : i32, i32
  }
  func.func @transform_3(%arg0: i32) -> (i32, i32) {
    %c0_i32 = arith.constant 0 : i32
    %c0_i32_0 = arith.constant 0 : i32
    %c0_i32_1 = arith.constant 0 : i32
    return %c0_i32, %c0_i32_0 : i32, i32
  }
  func.func @transform_4(%arg0: i32) -> (i32, i32, i32) {
    %c0_i32 = arith.constant 0 : i32
    %c0_i32_0 = arith.constant 0 : i32
    %c0_i32_1 = arith.constant 0 : i32
    return %arg0, %c0_i32, %c0_i32_0 : i32, i32, i32
  }
}

module attributes {stable_mosaic.version = 11 : i64} {
  func.func @_stats_kernel(%arg0: i32, %arg1: memref<1x32x32xf32, #tpu.memory_space<vmem>>, %arg2: memref<32x128xf32, #tpu.memory_space<vmem>>, %arg3: memref<1x1x29xf32, #tpu.memory_space<vmem>>, %arg4: memref<1x2x32x1xf32, #tpu.memory_space<vmem>>) attributes {dimension_semantics = [#tpu.dimension_semantics<parallel>], iteration_bounds = array<i64: 1>, scalar_prefetch = 0 : i64, scratch_operands = 0 : i64, tpu.core_type = #tpu.core_type<tc>, window_params = [{transform_indices = @transform_0, window_bounds = array<i64: 1, 32, 32>}, {pipeline_mode = #tpu.pipeline_mode<synchronous>, transform_indices = @transform_1, window_bounds = array<i64: 32, 128>}, {transform_indices = @transform_2, window_bounds = array<i64: 1, 1, 29>}, {transform_indices = @transform_3, window_bounds = array<i64: 1, 2, 32, 1>}]} {
    %c0 = arith.constant 0 : index
    %c0_0 = arith.constant 0 : index
    %c0_1 = arith.constant 0 : index
    %0 = vector.load %arg1[%c0, %c0_0, %c0_1] : memref<1x32x32xf32, #tpu.memory_space<vmem>>, vector<1x32x29xf32>
    %1 = vector.shape_cast %0 : vector<1x32x29xf32> to vector<32x29xf32>
    %c0_2 = arith.constant 0 : index
    %c0_3 = arith.constant 0 : index
    %c1 = arith.constant 1 : index
    %2 = vector.load %arg1[%c0_2, %c0_3, %c1] : memref<1x32x32xf32, #tpu.memory_space<vmem>>, vector<1x32x29xf32>
    %3 = vector.shape_cast %2 : vector<1x32x29xf32> to vector<32x29xf32>
    %c0_4 = arith.constant 0 : index
    %c0_5 = arith.constant 0 : index
    %c2 = arith.constant 2 : index
    %4 = vector.load %arg1[%c0_4, %c0_5, %c2] : memref<1x32x32xf32, #tpu.memory_space<vmem>>, vector<1x32x29xf32>
    %5 = vector.shape_cast %4 : vector<1x32x29xf32> to vector<32x29xf32>
    %c0_6 = arith.constant 0 : index
    %c0_7 = arith.constant 0 : index
    %c3 = arith.constant 3 : index
    %6 = vector.load %arg1[%c0_6, %c0_7, %c3] : memref<1x32x32xf32, #tpu.memory_space<vmem>>, vector<1x32x29xf32>
    %7 = vector.shape_cast %6 : vector<1x32x29xf32> to vector<32x29xf32>
    %8 = tpu.concatenate %1, %3, %5, %7 in 0 : vector<32x29xf32>, vector<32x29xf32>, vector<32x29xf32>, vector<32x29xf32> -> vector<128x29xf32>
    %c0_8 = arith.constant 0 : index
    %c0_9 = arith.constant 0 : index
    %9 = vector.load %arg2[%c0_8, %c0_9] : memref<32x128xf32, #tpu.memory_space<vmem>>, vector<32x128xf32>
    %cst = arith.constant dense<0.000000e+00> : vector<32x29xf32>
    %10 = tpu.matmul %9, %8, %cst {dimension_numbers = #tpu.dot_dimension_numbers<[1], [0], [0], [1], [0, 0, 1, 1], [], []>} : vector<32x128xf32>, vector<128x29xf32>, vector<32x29xf32> -> vector<32x29xf32>
    %c0_10 = arith.constant 0 : index
    %c0_11 = arith.constant 0 : index
    %c0_12 = arith.constant 0 : index
    %11 = vector.load %arg3[%c0_10, %c0_11, %c0_12] : memref<1x1x29xf32, #tpu.memory_space<vmem>>, vector<1x1x29xf32>
    %12 = vector.shape_cast %11 : vector<1x1x29xf32> to vector<1x29xf32>
    %13 = vector.shape_cast %12 : vector<1x29xf32> to vector<1x1x29xf32>
    %cst_13 = arith.constant dense<0.000000e+00> : vector<1xf32>
    %14 = vector.multi_reduction <add>, %13, %cst_13 [1, 2] : vector<1x1x29xf32> to vector<1xf32>
    %15 = vector.shape_cast %14 : vector<1xf32> to vector<1x1x1xf32>
    %16 = vector.extract %15[0, 0, 0] : f32 from vector<1x1x1xf32>
    %17 = vector.broadcast %16 : f32 to vector<1x1xf32>
    %18 = vector.broadcast %12 : vector<1x29xf32> to vector<32x29xf32>
    %19 = arith.mulf %10, %18 : vector<32x29xf32>
    %cst_14 = arith.constant dense<0.000000e+00> : vector<32xf32>
    %20 = vector.multi_reduction <add>, %19, %cst_14 [1] : vector<32x29xf32> to vector<32xf32>
    %21 = vector.shape_cast %20 : vector<32xf32> to vector<32x1xf32>
    %22 = vector.broadcast %17 : vector<1x1xf32> to vector<32x1xf32>
    %23 = arith.divf %21, %22 : vector<32x1xf32>
    %24 = vector.broadcast %23 : vector<32x1xf32> to vector<32x29xf32>
    %25 = arith.subf %10, %24 : vector<32x29xf32>
    %26 = arith.mulf %25, %25 : vector<32x29xf32>
    %27 = vector.broadcast %12 : vector<1x29xf32> to vector<32x29xf32>
    %28 = arith.mulf %26, %27 : vector<32x29xf32>
    %cst_15 = arith.constant dense<0.000000e+00> : vector<32xf32>
    %29 = vector.multi_reduction <add>, %28, %cst_15 [1] : vector<32x29xf32> to vector<32xf32>
    %30 = vector.shape_cast %29 : vector<32xf32> to vector<32x1xf32>
    %31 = vector.shape_cast %21 : vector<32x1xf32> to vector<1x32x1xf32>
    %32 = vector.shape_cast %30 : vector<32x1xf32> to vector<1x32x1xf32>
    %33 = tpu.concatenate %31, %32 in 0 : vector<1x32x1xf32>, vector<1x32x1xf32> -> vector<2x32x1xf32>
    %c0_16 = arith.constant 0 : index
    %c0_17 = arith.constant 0 : index
    %c0_18 = arith.constant 0 : index
    %c0_19 = arith.constant 0 : index
    %34 = vector.load %arg4[%c0_16, %c0_17, %c0_18, %c0_19] : memref<1x2x32x1xf32, #tpu.memory_space<vmem>>, vector<1x2x32x1xf32>
    %35 = vector.shape_cast %34 : vector<1x2x32x1xf32> to vector<2x32x1xf32>
    %36 = vector.shape_cast %33 : vector<2x32x1xf32> to vector<1x2x32x1xf32>
    tpu.vector_store %arg4[%c0_16, %c0_17, %c0_18, %c0_19], %36 {strides = array<i32>} : memref<1x2x32x1xf32, #tpu.memory_space<vmem>>, vector<1x2x32x1xf32>,
    return
  }
  func.func @transform_0(%arg0: i32) -> (i32, i32, i32) {
    %c0_i32 = arith.constant 0 : i32
    %c0_i32_0 = arith.constant 0 : i32
    %c0_i32_1 = arith.constant 0 : i32
    return %arg0, %c0_i32, %c0_i32_0 : i32, i32, i32
  }
  func.func @transform_1(%arg0: i32) -> (i32, i32) {
    %c0_i32 = arith.constant 0 : i32
    %c0_i32_0 = arith.constant 0 : i32
    %c0_i32_1 = arith.constant 0 : i32
    return %c0_i32, %c0_i32_0 : i32, i32
  }
  func.func @transform_2(%arg0: i32) -> (i32, i32, i32) {
    %c0_i32 = arith.constant 0 : i32
    %c0_i32_0 = arith.constant 0 : i32
    %c0_i32_1 = arith.constant 0 : i32
    return %arg0, %c0_i32, %c0_i32_0 : i32, i32, i32
  }
  func.func @transform_3(%arg0: i32) -> (i32, i32, i32, i32) {
    %c0_i32 = arith.constant 0 : i32
    %c0_i32_0 = arith.constant 0 : i32
    %c0_i32_1 = arith.constant 0 : i32
    %c0_i32_2 = arith.constant 0 : i32
    return %arg0, %c0_i32, %c0_i32_0, %c0_i32_1 : i32, i32, i32, i32
  }
}

</mosaic_0001>

<llo_original>
// kernel: agnostic_conv_block.2
$region0: #{agnostic_conv_block.2}
  #allocation0 [shape = 'u32[]', space=smem, size = 0x4, offset = 0x4, fixed_abs, tag = 'smem constant byte address 0x4 - core index']
  #allocation1 [shape = 'u32[144,128]{1,0:T(1,128)}', space=vmem, size = 0x12000, scoped, tag = 'internal scratch']
  %s0 = inlined_call_operand.vmem [shape: f32[1,32,32], index: 0, kind: input, shape index: {}]
  %s1 = inlined_call_operand.vmem [shape: f32[32,128], index: 1, kind: input, shape index: {}]
  %s2 = inlined_call_operand.vmem [shape: f32[1,1,29], index: 2, kind: input, shape index: {}]
  %s3 = inlined_call_operand.vmem [shape: f32[1,2,32,1], index: 3, kind: output, shape index: {}]
  %s4 = sld [smem:[#allocation0]]
  $region22: #{agnostic_conv_block.2} parent=0
    _
  %s6 = ssub.s32 1, %s4
  %s7 = scalar_select 0, %s6, %s4
  // Predicated region
  $region2: #{agnostic_conv_block.2} parent=0 // pred_check
    _
  $region3: #{agnostic_conv_block.2} parent=0 // pred_check_branch
    %9 = sbr.rel (0) target = $region5
  $region4: #{agnostic_conv_block.2} parent=0 // pred_region
    _
  $region5: #{agnostic_conv_block.2} parent=0 // pred_fallthru
    _
  // Predicated region
  $region6: #{agnostic_conv_block.2} parent=0 // pred_check
    _
  $region7: #{agnostic_conv_block.2} parent=0 // pred_check_branch
    %11 = sbr.rel (0) target = $region9
  $region8: #{agnostic_conv_block.2} parent=0 // pred_region
    _
  $region9: #{agnostic_conv_block.2} parent=0 // pred_fallthru
    _
  // Predicated region
  $region10: #{agnostic_conv_block.2} parent=0 // pred_check
    _
  $region11: #{agnostic_conv_block.2} parent=0 // pred_check_branch
    %13 = sbr.rel (0) target = $region13
  $region12: #{agnostic_conv_block.2} parent=0 // pred_region
    _
  $region13: #{agnostic_conv_block.2} parent=0 // pred_fallthru
    _
  %v14 = vld [vmem:[%s0] sm:$0xff]
  %v15 = vld [vmem:[%s0 + $0x8] sm:$0xff]
  %v16 = vld [vmem:[%s0 + $0x10] sm:$0xff]
  %v17 = vld [vmem:[%s0 + $0x18] sm:$0xff]
  %22 = vrot.lane.b32.xlu0 %v14, 127
  %v23 = vpop.permute.xlu0 %22
  %24 = vrot.lane.b32.xlu0 %v15, 127
  %v25 = vpop.permute.xlu0 %24
  %26 = vrot.lane.b32.xlu0 %v16, 127
  %v27 = vpop.permute.xlu0 %26
  %28 = vrot.lane.b32.xlu0 %v17, 127
  %v29 = vpop.permute.xlu0 %28
  %34 = vrot.lane.b32.xlu0 %v14, 126
  %v35 = vpop.permute.xlu0 %34
  %36 = vrot.lane.b32.xlu0 %v15, 126
  %v37 = vpop.permute.xlu0 %36
  %38 = vrot.lane.b32.xlu0 %v16, 126
  %v39 = vpop.permute.xlu0 %38
  %40 = vrot.lane.b32.xlu0 %v17, 126
  %v41 = vpop.permute.xlu0 %40
  %46 = vrot.lane.b32.xlu0 %v14, 125
  %v47 = vpop.permute.xlu0 %46
  %48 = vrot.lane.b32.xlu0 %v15, 125
  %v49 = vpop.permute.xlu0 %48
  %50 = vrot.lane.b32.xlu0 %v16, 125
  %v51 = vpop.permute.xlu0 %50
  %52 = vrot.lane.b32.xlu0 %v17, 125
  %v53 = vpop.permute.xlu0 %52
  %v58 = vld [vmem:[%s1] sm:$0xff]
  %v59 = vld [vmem:[%s1 + $0x8] sm:$0xff]
  %v60 = vld [vmem:[%s1 + $0x10] sm:$0xff]
  %v61 = vld [vmem:[%s1 + $0x18] sm:$0xff]
  %62 = vmatprep.subr.mxu0 0.0
  %63 = vmatpush1.msra.mxu0 %v53
  %64 = vmatprep.subr.mxu0 0.0
  %65 = vmatpush1.msra.mxu0 %v51
  %66 = vmatprep.subr.mxu0 0.0
  %67 = vmatpush1.msra.mxu0 %v49
  %68 = vmatprep.subr.mxu0 0.0
  %69 = vmatpush1.msra.mxu0 %v47
  %70 = vmatprep.subr.mxu0 0.0
  %71 = vmatpush1.msra.mxu0 %v41
  %72 = vmatprep.subr.mxu0 0.0
  %73 = vmatpush1.msra.mxu0 %v39
  %74 = vmatprep.subr.mxu0 0.0
  %75 = vmatpush1.msra.mxu0 %v37
  %76 = vmatprep.subr.mxu0 0.0
  %77 = vmatpush1.msra.mxu0 %v35
  %78 = vmatprep.subr.mxu0 0.0
  %79 = vmatpush1.msra.mxu0 %v29
  %80 = vmatprep.subr.mxu0 0.0
  %81 = vmatpush1.msra.mxu0 %v27
  %82 = vmatprep.subr.mxu0 0.0
  %83 = vmatpush1.msra.mxu0 %v25
  %84 = vmatprep.subr.mxu0 0.0
  %85 = vmatpush1.msra.mxu0 %v23
  %86 = vmatprep.subr.mxu0 0.0
  %87 = vmatpush1.msra.mxu0 %v17
  %88 = vmatprep.subr.mxu0 0.0
  %89 = vmatpush1.msra.mxu0 %v16
  %90 = vmatprep.subr.mxu0 0.0
  %91 = vmatpush1.msra.mxu0 %v15
  %92 = vmatprep.subr.mxu0 0.0
  %93 = vmatpush1.msra.mxu0 %v14
  %94 = vmatprep.subr.mxu0 0.0
  %95 = vmatpush2.msra.mxu0 0.0
  %96 = vmatprep.subr.mxu0 0.0
  %97 = vmatpush2.msra.mxu0 0.0
  %98 = vmatprep.subr.mxu0 0.0
  %99 = vmatpush2.msra.mxu0 0.0
  %100 = vmatprep.subr.mxu0 0.0
  %101 = vmatpush2.msra.mxu0 0.0
  %102 = vmatprep.subr.mxu0 0.0
  %103 = vmatpush2.msra.mxu0 0.0
  %104 = vmatprep.subr.mxu0 0.0
  %105 = vmatpush2.msra.mxu0 0.0
  %106 = vmatprep.subr.mxu0 0.0
  %107 = vmatpush2.msra.mxu0 0.0
  %108 = vmatprep.subr.mxu0 0.0
  %109 = vmatpush2.msra.mxu0 0.0
  %110 = vmatprep.subr.mxu0 0.0
  %111 = vmatpush2.msra.mxu0 0.0
  %112 = vmatprep.subr.mxu0 0.0
  %113 = vmatpush2.msra.mxu0 0.0
  %114 = vmatprep.subr.mxu0 0.0
  %115 = vmatpush2.msra.mxu0 0.0
  %116 = vmatprep.subr.mxu0 0.0
  %117 = vmatpush2.msra.mxu0 0.0
  %118 = vmatprep.subr.mxu0 0.0
  %119 = vmatpush2.msra.mxu0 0.0
  %120 = vmatprep.subr.mxu0 0.0
  %121 = vmatpush2.msra.mxu0 0.0
  %122 = vmatprep.subr.mxu0 0.0
  %123 = vmatpush2.msra.mxu0 0.0
  %124 = vmatprep.subr.mxu0 0.0
  %125 = vmatpush2.msra.mxu0 0.0
  %126 = vmatprep.mubr.f32.mxu0 0.0
  %127 = vmatmul.mubr.f32.gmra.mxu0 %v58
  %v128 = vpop.f32.mrf.mxu0
  %v129 = vadd.f32 0.0, %v128
  %v130 = vpop.f32.mrf.mxu0
  %131 = vmatprep.mubr.f32.mxu0 0.0
  %132 = vmatmul.mubr.f32.gmra.mxu0 %v59
  %v133 = vpop.f32.mrf.mxu0
  %v134 = vadd.f32 0.0, %v133
  %v135 = vpop.f32.mrf.mxu0
  %136 = vmatprep.mubr.f32.mxu0 0.0
  %137 = vmatmul.mubr.f32.gmra.mxu0 %v60
  %v138 = vpop.f32.mrf.mxu0
  %v139 = vadd.f32 0.0, %v138
  %v140 = vpop.f32.mrf.mxu0
  %141 = vmatprep.mubr.f32.mxu0 0.0
  %142 = vmatmul.mubr.f32.gmra.mxu0 %v61
  %v143 = vpop.f32.mrf.mxu0
  %v144 = vadd.f32 0.0, %v143
  %v145 = vpop.f32.mrf.mxu0
  %146 = vdwg.mxu0
  %v147 = vld [vmem:[%s2] sm:$0x1]
  %vm148 = vcmask 229376
  %v149 = vsel %vm148, %v147, 0.0
  %150 = vadd.xlane.f32.xlu0 %v149
  %v151 = vpop.xlane.xlu0 %150
  %v152 = vrot.slane %v151, 4
  %v153 = vadd.f32 %v151, %v152
  %v154 = vrot.slane %v153, 2
  %v155 = vadd.f32 %v153, %v154
  %v156 = vrot.slane %v155, 1
  %v157 = vadd.f32 %v155, %v156
  %s158 = vtos %v157
  %v160 = vlaneseq
  %v161 = vshrl.u32 %v160, 7
  %v162 = vsub.s32 0, %v161
  %v163 = vrot.slane %v147, %v162
  %v165 = vmul.f32 %v129, %v163
  %v166 = vmul.f32 %v134, %v163
  %v167 = vmul.f32 %v139, %v163
  %v168 = vmul.f32 %v144, %v163
  %vm169 = vcmask 236544
  %v170 = vsel %vm169, %v165, 0.0
  %171 = vadd.xlane.f32.xlu0 %v170
  %v172 = vpop.xlane.xlu0 %171
  %v173 = vsel %vm169, %v166, 0.0
  %174 = vadd.xlane.f32.xlu0 %v173
  %v175 = vpop.xlane.xlu0 %174
  %v176 = vsel %vm169, %v167, 0.0
  %177 = vadd.xlane.f32.xlu0 %v176
  %v178 = vpop.xlane.xlu0 %177
  %v179 = vsel %vm169, %v168, 0.0
  %180 = vadd.xlane.f32.xlu0 %v179
  %v181 = vpop.xlane.xlu0 %180
  %v182 = vstv %s158
  %v183 = vrcp.pop %v182
  %v184 = vmul.f32 %v172, %v183
  %v185 = vmul.f32 %v175, %v183
  %v186 = vmul.f32 %v178, %v183
  %v187 = vmul.f32 %v181, %v183
  %v188 = vsub.f32 %v129, %v184
  %v189 = vsub.f32 %v134, %v185
  %v190 = vsub.f32 %v139, %v186
  %v191 = vsub.f32 %v144, %v187
  %v192 = vmul.f32 %v188, %v188
  %v193 = vmul.f32 %v189, %v189
  %v194 = vmul.f32 %v190, %v190
  %v195 = vmul.f32 %v191, %v191
  %v196 = vmul.f32 %v192, %v163
  %v197 = vmul.f32 %v193, %v163
  %v198 = vmul.f32 %v194, %v163
  %v199 = vmul.f32 %v195, %v163
  %v200 = vsel %vm169, %v196, 0.0
  %201 = vadd.xlane.f32.xlu0 %v200
  %v202 = vpop.xlane.xlu0 %201
  %v203 = vsel %vm169, %v197, 0.0
  %204 = vadd.xlane.f32.xlu0 %v203
  %v205 = vpop.xlane.xlu0 %204
  %v206 = vsel %vm169, %v198, 0.0
  %207 = vadd.xlane.f32.xlu0 %v206
  %v208 = vpop.xlane.xlu0 %207
  %v209 = vsel %vm169, %v199, 0.0
  %210 = vadd.xlane.f32.xlu0 %v209
  %v211 = vpop.xlane.xlu0 %210
  %vm212 = vcmask 7168
  %213 = vst.msk [vmem:[%s3] sm:$0xff] %vm212, %v172
  %214 = vst.msk [vmem:[%s3 + $0x8] sm:$0xff] %vm212, %v175
  %215 = vst.msk [vmem:[%s3 + $0x10] sm:$0xff] %vm212, %v178
  %216 = vst.msk [vmem:[%s3 + $0x18] sm:$0xff] %vm212, %v181
  %217 = vst.msk [vmem:[%s3 + $0x20] sm:$0xff] %vm212, %v202
  %218 = vst.msk [vmem:[%s3 + $0x28] sm:$0xff] %vm212, %v205
  %219 = vst.msk [vmem:[%s3 + $0x30] sm:$0xff] %vm212, %v208
  %220 = vst.msk [vmem:[%s3 + $0x38] sm:$0xff] %vm212, %v211
  // Predicated region
  $region14: #{agnostic_conv_block.2} parent=0 // pred_check
    _
  $region15: #{agnostic_conv_block.2} parent=0 // pred_check_branch
    %222 = sbr.rel (0) target = $region17
  $region16: #{agnostic_conv_block.2} parent=0 // pred_region
    _
  $region17: #{agnostic_conv_block.2} parent=0 // pred_fallthru
    _
  // Predicated region
  $region18: #{agnostic_conv_block.2} parent=0 // pred_check
    _
  $region19: #{agnostic_conv_block.2} parent=0 // pred_check_branch
    %224 = sbr.rel (0) target = $region21
  $region20: #{agnostic_conv_block.2} parent=0 // pred_region
    _
  $region21: #{agnostic_conv_block.2} parent=0 // pred_fallthru
    _

// kernel: agnostic_conv_block.3
$region0: #{agnostic_conv_block.3}
  #allocation0 [shape = 'u32[]', space=smem, size = 0x4, offset = 0x4, fixed_abs, tag = 'smem constant byte address 0x4 - core index']
  #allocation1 [shape = 'u32[144,128]{1,0:T(1,128)}', space=vmem, size = 0x12000, scoped, tag = 'internal scratch']
  %s0 = inlined_call_operand.vmem [shape: f32[1,32,32], index: 0, kind: input, shape index: {}]
  %s1 = inlined_call_operand.vmem [shape: f32[32,128], index: 1, kind: input, shape index: {}]
  %s2 = inlined_call_operand.vmem [shape: f32[32,1], index: 2, kind: input, shape index: {}]
  %s3 = inlined_call_operand.vmem [shape: f32[32,1], index: 3, kind: input, shape index: {}]
  %s4 = inlined_call_operand.vmem [shape: f32[2,32,13], index: 4, kind: output, shape index: {}]
  %s5 = sld [smem:[#allocation0]]
  $region26: #{agnostic_conv_block.3} parent=0
    _
  %s7 = ssub.s32 1, %s5
  %s8 = scalar_select 0, %s7, %s5
  // Predicated region
  $region2: #{agnostic_conv_block.3} parent=0 // pred_check
    _
  $region3: #{agnostic_conv_block.3} parent=0 // pred_check_branch
    %10 = sbr.rel (0) target = $region5
  $region4: #{agnostic_conv_block.3} parent=0 // pred_region
    _
  $region5: #{agnostic_conv_block.3} parent=0 // pred_fallthru
    _
  // Predicated region
  $region6: #{agnostic_conv_block.3} parent=0 // pred_check
    _
  $region7: #{agnostic_conv_block.3} parent=0 // pred_check_branch
    %12 = sbr.rel (0) target = $region9
  $region8: #{agnostic_conv_block.3} parent=0 // pred_region
    _
  $region9: #{agnostic_conv_block.3} parent=0 // pred_fallthru
    _
  // Predicated region
  $region10: #{agnostic_conv_block.3} parent=0 // pred_check
    _
  $region11: #{agnostic_conv_block.3} parent=0 // pred_check_branch
    %14 = sbr.rel (0) target = $region13
  $region12: #{agnostic_conv_block.3} parent=0 // pred_region
    _
  $region13: #{agnostic_conv_block.3} parent=0 // pred_fallthru
    _
  // Predicated region
  $region14: #{agnostic_conv_block.3} parent=0 // pred_check
    _
  $region15: #{agnostic_conv_block.3} parent=0 // pred_check_branch
    %16 = sbr.rel (0) target = $region17
  $region16: #{agnostic_conv_block.3} parent=0 // pred_region
    _
  $region17: #{agnostic_conv_block.3} parent=0 // pred_fallthru
    _
  %v17 = vld [vmem:[%s0] sm:$0xff]
  %v18 = vld [vmem:[%s0 + $0x8] sm:$0xff]
  %v19 = vld [vmem:[%s0 + $0x10] sm:$0xff]
  %v20 = vld [vmem:[%s0 + $0x18] sm:$0xff]
  %25 = vrot.lane.b32.xlu0 %v17, 127
  %v26 = vpop.permute.xlu0 %25
  %27 = vrot.lane.b32.xlu0 %v18, 127
  %v28 = vpop.permute.xlu0 %27
  %29 = vrot.lane.b32.xlu0 %v19, 127
  %v30 = vpop.permute.xlu0 %29
  %31 = vrot.lane.b32.xlu0 %v20, 127
  %v32 = vpop.permute.xlu0 %31
  %37 = vrot.lane.b32.xlu0 %v17, 126
  %v38 = vpop.permute.xlu0 %37
  %39 = vrot.lane.b32.xlu0 %v18, 126
  %v40 = vpop.permute.xlu0 %39
  %41 = vrot.lane.b32.xlu0 %v19, 126
  %v42 = vpop.permute.xlu0 %41
  %43 = vrot.lane.b32.xlu0 %v20, 126
  %v44 = vpop.permute.xlu0 %43
  %49 = vrot.lane.b32.xlu0 %v17, 125
  %v50 = vpop.permute.xlu0 %49
  %51 = vrot.lane.b32.xlu0 %v18, 125
  %v52 = vpop.permute.xlu0 %51
  %53 = vrot.lane.b32.xlu0 %v19, 125
  %v54 = vpop.permute.xlu0 %53
  %55 = vrot.lane.b32.xlu0 %v20, 125
  %v56 = vpop.permute.xlu0 %55
  %v61 = vld [vmem:[%s1] sm:$0xff]
  %v62 = vld [vmem:[%s1 + $0x8] sm:$0xff]
  %v63 = vld [vmem:[%s1 + $0x10] sm:$0xff]
  %v64 = vld [vmem:[%s1 + $0x18] sm:$0xff]
  %65 = vmatprep.subr.mxu0 0.0
  %66 = vmatpush1.msra.mxu0 %v56
  %67 = vmatprep.subr.mxu0 0.0
  %68 = vmatpush1.msra.mxu0 %v54
  %69 = vmatprep.subr.mxu0 0.0
  %70 = vmatpush1.msra.mxu0 %v52
  %71 = vmatprep.subr.mxu0 0.0
  %72 = vmatpush1.msra.mxu0 %v50
  %73 = vmatprep.subr.mxu0 0.0
  %74 = vmatpush1.msra.mxu0 %v44
  %75 = vmatprep.subr.mxu0 0.0
  %76 = vmatpush1.msra.mxu0 %v42
  %77 = vmatprep.subr.mxu0 0.0
  %78 = vmatpush1.msra.mxu0 %v40
  %79 = vmatprep.subr.mxu0 0.0
  %80 = vmatpush1.msra.mxu0 %v38
  %81 = vmatprep.subr.mxu0 0.0
  %82 = vmatpush1.msra.mxu0 %v32
  %83 = vmatprep.subr.mxu0 0.0
  %84 = vmatpush1.msra.mxu0 %v30
  %85 = vmatprep.subr.mxu0 0.0
  %86 = vmatpush1.msra.mxu0 %v28
  %87 = vmatprep.subr.mxu0 0.0
  %88 = vmatpush1.msra.mxu0 %v26
  %89 = vmatprep.subr.mxu0 0.0
  %90 = vmatpush1.msra.mxu0 %v20
  %91 = vmatprep.subr.mxu0 0.0
  %92 = vmatpush1.msra.mxu0 %v19
  %93 = vmatprep.subr.mxu0 0.0
  %94 = vmatpush1.msra.mxu0 %v18
  %95 = vmatprep.subr.mxu0 0.0
  %96 = vmatpush1.msra.mxu0 %v17
  %97 = vmatprep.subr.mxu0 0.0
  %98 = vmatpush2.msra.mxu0 0.0
  %99 = vmatprep.subr.mxu0 0.0
  %100 = vmatpush2.msra.mxu0 0.0
  %101 = vmatprep.subr.mxu0 0.0
  %102 = vmatpush2.msra.mxu0 0.0
  %103 = vmatprep.subr.mxu0 0.0
  %104 = vmatpush2.msra.mxu0 0.0
  %105 = vmatprep.subr.mxu0 0.0
  %106 = vmatpush2.msra.mxu0 0.0
  %107 = vmatprep.subr.mxu0 0.0
  %108 = vmatpush2.msra.mxu0 0.0
  %109 = vmatprep.subr.mxu0 0.0
  %110 = vmatpush2.msra.mxu0 0.0
  %111 = vmatprep.subr.mxu0 0.0
  %112 = vmatpush2.msra.mxu0 0.0
  %113 = vmatprep.subr.mxu0 0.0
  %114 = vmatpush2.msra.mxu0 0.0
  %115 = vmatprep.subr.mxu0 0.0
  %116 = vmatpush2.msra.mxu0 0.0
  %117 = vmatprep.subr.mxu0 0.0
  %118 = vmatpush2.msra.mxu0 0.0
  %119 = vmatprep.subr.mxu0 0.0
  %120 = vmatpush2.msra.mxu0 0.0
  %121 = vmatprep.subr.mxu0 0.0
  %122 = vmatpush2.msra.mxu0 0.0
  %123 = vmatprep.subr.mxu0 0.0
  %124 = vmatpush2.msra.mxu0 0.0
  %125 = vmatprep.subr.mxu0 0.0
  %126 = vmatpush2.msra.mxu0 0.0
  %127 = vmatprep.subr.mxu0 0.0
  %128 = vmatpush2.msra.mxu0 0.0
  %129 = vmatprep.mubr.f32.mxu0 0.0
  %130 = vmatmul.mubr.f32.gmra.mxu0 %v61
  %v131 = vpop.f32.mrf.mxu0
  %v132 = vadd.f32 0.0, %v131
  %v133 = vpop.f32.mrf.mxu0
  %134 = vmatprep.mubr.f32.mxu0 0.0
  %135 = vmatmul.mubr.f32.gmra.mxu0 %v62
  %v136 = vpop.f32.mrf.mxu0
  %v137 = vadd.f32 0.0, %v136
  %v138 = vpop.f32.mrf.mxu0
  %139 = vmatprep.mubr.f32.mxu0 0.0
  %140 = vmatmul.mubr.f32.gmra.mxu0 %v63
  %v141 = vpop.f32.mrf.mxu0
  %v142 = vadd.f32 0.0, %v141
  %v143 = vpop.f32.mrf.mxu0
  %144 = vmatprep.mubr.f32.mxu0 0.0
  %145 = vmatmul.mubr.f32.gmra.mxu0 %v64
  %v146 = vpop.f32.mrf.mxu0
  %v147 = vadd.f32 0.0, %v146
  %v148 = vpop.f32.mrf.mxu0
  %149 = vdwg.mxu0
  %v150 = vld [vmem:[%s2] sm:$0xff]
  %v151 = vld [vmem:[%s2 + $0x8] sm:$0xff]
  %v152 = vld [vmem:[%s2 + $0x10] sm:$0xff]
  %v153 = vld [vmem:[%s2 + $0x18] sm:$0xff]
  %155 = vset.pattern.permute.xlu0 0
  %156 = vperm.xlu0 %155, %v150
  %v157 = vpop.permute.xlu0 %156
  %160 = vset.pattern.permute.xlu0 0
  %161 = vperm.xlu0 %160, %v151
  %v162 = vpop.permute.xlu0 %161
  %165 = vset.pattern.permute.xlu0 0
  %166 = vperm.xlu0 %165, %v152
  %v167 = vpop.permute.xlu0 %166
  %170 = vset.pattern.permute.xlu0 0
  %171 = vperm.xlu0 %170, %v153
  %v172 = vpop.permute.xlu0 %171
  %v174 = vmul.f32 %v132, %v157
  %v175 = vmul.f32 %v137, %v162
  %v176 = vmul.f32 %v142, %v167
  %v177 = vmul.f32 %v147, %v172
  %v178 = vld [vmem:[%s3] sm:$0xff]
  %v179 = vld [vmem:[%s3 + $0x8] sm:$0xff]
  %v180 = vld [vmem:[%s3 + $0x10] sm:$0xff]
  %v181 = vld [vmem:[%s3 + $0x18] sm:$0xff]
  %183 = vset.pattern.permute.xlu0 0
  %184 = vperm.xlu0 %183, %v178
  %v185 = vpop.permute.xlu0 %184
  %188 = vset.pattern.permute.xlu0 0
  %189 = vperm.xlu0 %188, %v179
  %v190 = vpop.permute.xlu0 %189
  %193 = vset.pattern.permute.xlu0 0
  %194 = vperm.xlu0 %193, %v180
  %v195 = vpop.permute.xlu0 %194
  %198 = vset.pattern.permute.xlu0 0
  %199 = vperm.xlu0 %198, %v181
  %v200 = vpop.permute.xlu0 %199
  %v202 = vadd.f32 %v174, %v185
  %v203 = vadd.f32 %v175, %v190
  %v204 = vadd.f32 %v176, %v195
  %v205 = vadd.f32 %v177, %v200
  %v206 = vmax.f32 %v202, 0.0
  %v207 = vmax.f32 %v203, 0.0
  %v208 = vmax.f32 %v204, 0.0
  %v209 = vmax.f32 %v205, 0.0
  %vm210 = vcmask 105472
  %211 = vst.msk [vmem:[%s4] sm:$0xff] %vm210, %v206
  %212 = vst.msk [vmem:[%s4 + $0x8] sm:$0xff] %vm210, %v207
  %213 = vst.msk [vmem:[%s4 + $0x10] sm:$0xff] %vm210, %v208
  %214 = vst.msk [vmem:[%s4 + $0x18] sm:$0xff] %vm210, %v209
  %219 = vrot.lane.b32.xlu0 %v206, 112
  %v220 = vpop.permute.xlu0 %219
  %221 = vrot.lane.b32.xlu0 %v207, 112
  %v222 = vpop.permute.xlu0 %221
  %223 = vrot.lane.b32.xlu0 %v208, 112
  %v224 = vpop.permute.xlu0 %223
  %225 = vrot.lane.b32.xlu0 %v209, 112
  %v226 = vpop.permute.xlu0 %225
  %s231 = scalar_lea.vmem %s4, 32
  %232 = vst.msk [vmem:[%s231] sm:$0xff] %vm210, %v220
  %233 = vst.msk [vmem:[%s231 + $0x8] sm:$0xff] %vm210, %v222
  %234 = vst.msk [vmem:[%s231 + $0x10] sm:$0xff] %vm210, %v224
  %235 = vst.msk [vmem:[%s231 + $0x18] sm:$0xff] %vm210, %v226
  // Predicated region
  $region18: #{agnostic_conv_block.3} parent=0 // pred_check
    _
  $region19: #{agnostic_conv_block.3} parent=0 // pred_check_branch
    %237 = sbr.rel (0) target = $region21
  $region20: #{agnostic_conv_block.3} parent=0 // pred_region
    _
  $region21: #{agnostic_conv_block.3} parent=0 // pred_fallthru
    _
  // Predicated region
  $region22: #{agnostic_conv_block.3} parent=0 // pred_check
    _
  $region23: #{agnostic_conv_block.3} parent=0 // pred_check_branch
    %239 = sbr.rel (0) target = $region25
  $region24: #{agnostic_conv_block.3} parent=0 // pred_region
    _
  $region25: #{agnostic_conv_block.3} parent=0 // pred_fallthru
    _

</llo_original>
